<compile_context>
chip_gen: v7x
topology: tpu7x:2x2x1
jax: 0.10.0
libtpu: 0.0.40
codegen_flags: <defaults>
</compile_context>

<pallas_src>
import math

import jax
import jax.numpy as jnp
from jax.experimental import pallas as pl
from jax.experimental.pallas import tpu as pltpu

HIDDEN_DIM = 32
INPUT_DIM = 13
LAYER_DIM = 1
OUTPUT_DIM = 1


def _make_lstm_recurrence_kernel(T, B, H):
    """Serial LSTM recurrence kernel for static (T, B, H).

    Kernel refs:
      gx_ref    : (T*B, 4H)  precomputed x_t @ W_ih^T + (b_ih + b_hh), time-major
      whh_ref   : (H, 4H)    hidden->hidden weights (transposed)
      hfull_ref : (B, 4H)    output: final hidden state lives in lanes [0, H)
    """
    G = 4 * H

    def kernel(gx_ref, whh_ref, hfull_ref):
        whh = whh_ref[...]  # (H, 4H), kept resident across the loop

        # Hoisted per-lane activation selectors (computed once, before the
        # loop).  Lanes [2H, 3H) = 'g' gate use tanh(x); all other lanes use
        # sigmoid(x) = 0.5 + 0.5*tanh(0.5*x).  -> one full-width EUP pass/step.
        lane = jax.lax.broadcasted_iota(jnp.int32, (B, G), 1)
        is_g = jnp.logical_and(lane >= 2 * H, lane < 3 * H)
        scale = jnp.where(is_g, 1.0, 0.5).astype(jnp.float32)
        offset = jnp.where(is_g, 0.0, 0.5).astype(jnp.float32)

        # State carried at full 128-lane width; only lanes [0, H) are valid.
        # Garbage lanes stay bounded (products of gate values), never touch the
        # valid lanes, and never enter the matmul (LHS is sliced at offset 0).
        init = (jnp.zeros((B, G), jnp.float32),   # h_full
                jnp.zeros((B, G), jnp.float32))   # c_full

        def step(t, carry):
            h_full, c_full = carry
            h_prev = h_full[:, :H]                       # offset-0 slice, no lane move

            start = pl.multiple_of(t * B, B)             # B is a multiple of 8
            pre = gx_ref[pl.ds(start, B), :] + jnp.dot(
                h_prev, whh, preferred_element_type=jnp.float32)  # (B, 4H)

            # Activated gates [i | f | g | o] in one EUP pass.
            act = offset + scale * jnp.tanh(scale * pre)

            # Bring f / g / o into lanes [0, H) (i is already there).
            f_al = pltpu.roll(act, shift=3 * H, axis=1)  # lanes [0,H) <- f
            g_al = pltpu.roll(act, shift=2 * H, axis=1)  # lanes [0,H) <- g
            o_al = pltpu.roll(act, shift=1 * H, axis=1)  # lanes [0,H) <- o

            c_new = f_al * c_full + act * g_al           # lanes [0,H): f*c + i*g
            h_new = o_al * jnp.tanh(c_new)               # lanes [0,H): o*tanh(c)
            return (h_new, c_new)

        h_full_T, _ = jax.lax.fori_loop(0, T, step, init, unroll=min(T, 8))

        # Lane-dense (B, 4H) store; the wrapper slices out lanes [0, H).
        hfull_ref[...] = h_full_T

    return kernel


def lstm_classifier_forward(x_btd, params):
    """x_btd: (B, T, D) float32 (PyTorch batch_first convention) -> (B, 1)."""
    B, T, D = x_btd.shape
    H = HIDDEN_DIM
    G = 4 * H

    # Pad batch up to the f32 sublane count (8) for vreg-dense per-step math.
    B_pad = max(8, ((B + 7) // 8) * 8)

    x = x_btd.astype(jnp.float32)
    x_tbd = jnp.transpose(x, (1, 0, 2))                  # time-major (T, B, D)
    if B_pad != B:
        x_tbd = jnp.pad(x_tbd, ((0, 0), (0, B_pad - B), (0, 0)))

    wih_t = params["w_ih"].T.astype(jnp.float32)         # (D, 4H)
    whh_t = params["w_hh"].T.astype(jnp.float32)         # (H, 4H)
    bias = (params["b_ih"] + params["b_hh"]).astype(jnp.float32)  # (4H,)

    # Hoisted input projection in XLA (not on the serial critical path).
    gx = jnp.dot(x_tbd, wih_t, preferred_element_type=jnp.float32) + bias
    gx = gx.reshape(T * B_pad, G)                        # (T*B_pad, 4H)

    kernel = _make_lstm_recurrence_kernel(T, B_pad, H)

    h_full = pl.pallas_call(
        kernel,
        out_shape=jax.ShapeDtypeStruct((B_pad, G), jnp.float32),
        in_specs=[
            pl.BlockSpec(memory_space=pltpu.MemorySpace.VMEM),   # gx
            pl.BlockSpec(memory_space=pltpu.MemorySpace.VMEM),   # W_hh^T
        ],
        out_specs=pl.BlockSpec(memory_space=pltpu.MemorySpace.VMEM),
    )(gx, whh_t)

    h_T = h_full[:B, :H]                                 # drop padding + garbage lanes
    # Final Linear (H -> 1): trivial, done in XLA per perf review.
    w_fc = params["w_fc"].astype(jnp.float32)
    b_fc = params["b_fc"].astype(jnp.float32)
    return jnp.dot(h_T, w_fc.T) + b_fc


def init_params(key, input_dim=INPUT_DIM, hidden_dim=HIDDEN_DIM,
                output_dim=OUTPUT_DIM):
    """Deterministic init mirroring PyTorch's uniform(-1/sqrt(H), 1/sqrt(H))."""
    k = 1.0 / math.sqrt(hidden_dim)
    keys = jax.random.split(key, 6)
    u = lambda kk, shape: jax.random.uniform(kk, shape, jnp.float32, -k, k)
    return {
        "w_ih": u(keys[0], (4 * hidden_dim, input_dim)),
        "w_hh": u(keys[1], (4 * hidden_dim, hidden_dim)),
        "b_ih": u(keys[2], (4 * hidden_dim,)),
        "b_hh": u(keys[3], (4 * hidden_dim,)),
        "w_fc": u(keys[4], (output_dim, hidden_dim)),
        "b_fc": u(keys[5], (output_dim,)),
    }


def _reference_forward(x_btd, params):
    """Pure-JAX reference of the PyTorch LSTMClassifier forward."""
    B, T, D = x_btd.shape
    H = HIDDEN_DIM
    wih, whh = params["w_ih"], params["w_hh"]
    b = params["b_ih"] + params["b_hh"]

    def step(carry, x_t):
        h, c = carry
        gates = x_t @ wih.T + h @ whh.T + b
        i = jax.nn.sigmoid(gates[:, 0 * H:1 * H])
        f = jax.nn.sigmoid(gates[:, 1 * H:2 * H])
        g = jnp.tanh(gates[:, 2 * H:3 * H])
        o = jax.nn.sigmoid(gates[:, 3 * H:4 * H])
        c = f * c + i * g
        h = o * jnp.tanh(c)
        return (h, c), None

    h0 = jnp.zeros((B, H), jnp.float32)
    c0 = jnp.zeros((B, H), jnp.float32)
    (hT, _), _ = jax.lax.scan(step, (h0, c0), jnp.transpose(x_btd, (1, 0, 2)))
    return hT @ params["w_fc"].T + params["b_fc"]


if __name__ == "__main__":
    key = jax.random.PRNGKey(0)
    k_x, k_p = jax.random.split(key)

    batch, seq = 2, 8
    x = jax.random.normal(k_x, (batch, seq, INPUT_DIM), jnp.float32)
    params = init_params(k_p)

    forward = jax.jit(lstm_classifier_forward)
    out = jax.block_until_ready(forward(x, params))

    ref = _reference_forward(x, params)
    assert out.shape == (batch, OUTPUT_DIM)
    assert jnp.allclose(out, ref, rtol=1e-3, atol=1e-3), (out, ref)

    print("KERNEL_OK")
</pallas_src>

<mosaic_0001>
module attributes {stable_mosaic.version = 11 : i64} {
  func.func @kernel(%arg0: memref<64x128xf32, #tpu.memory_space<vmem>>, %arg1: memref<32x128xf32, #tpu.memory_space<vmem>>, %arg2: memref<8x128xf32, #tpu.memory_space<vmem>>) attributes {dimension_semantics = [], scalar_prefetch = 0 : i64, scratch_operands = 0 : i64, tpu.core_type = #tpu.core_type<tc>} {
    %c0 = arith.constant 0 : index
    %c0_0 = arith.constant 0 : index
    %0 = vector.load %arg1[%c0, %c0_0] : memref<32x128xf32, #tpu.memory_space<vmem>>, vector<32x128xf32>
    %1 = tpu.iota {dimensions = array<i32: 1>} : vector<8x128xi32>
    %c64_i32 = arith.constant 64 : i32
    %2 = vector.broadcast %c64_i32 : i32 to vector<8x128xi32>
    %3 = arith.cmpi sge, %1, %2 : vector<8x128xi32>
    %c96_i32 = arith.constant 96 : i32
    %4 = vector.broadcast %c96_i32 : i32 to vector<8x128xi32>
    %5 = arith.cmpi slt, %1, %4 : vector<8x128xi32>
    %6 = arith.andi %3, %5 : vector<8x128xi1>
    %cst = arith.constant 1.000000e+00 : f32
    %cst_1 = arith.constant 5.000000e-01 : f32
    %7 = vector.broadcast %cst : f32 to vector<8x128xf32>
    %8 = vector.broadcast %cst_1 : f32 to vector<8x128xf32>
    %9 = arith.select %6, %7, %8 : vector<8x128xi1>, vector<8x128xf32>
    %cst_2 = arith.constant 0.000000e+00 : f32
    %cst_3 = arith.constant 5.000000e-01 : f32
    %10 = vector.broadcast %cst_2 : f32 to vector<8x128xf32>
    %11 = vector.broadcast %cst_3 : f32 to vector<8x128xf32>
    %12 = arith.select %6, %10, %11 : vector<8x128xi1>, vector<8x128xf32>
    %cst_4 = arith.constant 0.000000e+00 : f32
    %13 = vector.broadcast %cst_4 : f32 to vector<8x128xf32>
    %cst_5 = arith.constant 0.000000e+00 : f32
    %14 = vector.broadcast %cst_5 : f32 to vector<8x128xf32>
    %c0_i32 = arith.constant 0 : i32
    %15 = vector.extract_strided_slice %13 {offsets = [0, 0], sizes = [8, 32], strides = [1, 1]} : vector<8x128xf32> to vector<8x32xf32>
    %c8_i32 = arith.constant 8 : i32
    %16 = arith.muli %c0_i32, %c8_i32 : i32
    %17 = tpu.assume_multiple %16, 8 : i32
    %18 = arith.index_cast %17 : i32 to index
    %c0_6 = arith.constant 0 : index
    %19 = vector.load %arg0[%18, %c0_6] : memref<64x128xf32, #tpu.memory_space<vmem>>, vector<8x128xf32>
    %cst_7 = arith.constant dense<0.000000e+00> : vector<8x128xf32>
    %20 = tpu.matmul %15, %0, %cst_7 {dimension_numbers = #tpu.dot_dimension_numbers<[1], [0], [0], [1], [0, 0, 1, 1], [], []>} : vector<8x32xf32>, vector<32x128xf32>, vector<8x128xf32> -> vector<8x128xf32>
    %21 = arith.addf %19, %20 : vector<8x128xf32>
    %22 = arith.mulf %9, %21 : vector<8x128xf32>
    %23 = math.tanh %22 : vector<8x128xf32>
    %24 = arith.mulf %9, %23 : vector<8x128xf32>
    %25 = arith.addf %12, %24 : vector<8x128xf32>
    %c96_i32_8 = arith.constant 96 : i32
    %26 = tpu.dynamic_rotate %25 by %c96_i32_8 dim 1 : vector<8x128xf32>, i32 -> vector<8x128xf32>
    %c64_i32_9 = arith.constant 64 : i32
    %27 = tpu.dynamic_rotate %25 by %c64_i32_9 dim 1 : vector<8x128xf32>, i32 -> vector<8x128xf32>
    %c32_i32 = arith.constant 32 : i32
    %28 = tpu.dynamic_rotate %25 by %c32_i32 dim 1 : vector<8x128xf32>, i32 -> vector<8x128xf32>
    %29 = arith.mulf %26, %14 : vector<8x128xf32>
    %30 = arith.mulf %25, %27 : vector<8x128xf32>
    %31 = arith.addf %29, %30 : vector<8x128xf32>
    %32 = math.tanh %31 : vector<8x128xf32>
    %33 = arith.mulf %28, %32 : vector<8x128xf32>
    %c1_i32 = arith.constant 1 : i32
    %34 = vector.extract_strided_slice %33 {offsets = [0, 0], sizes = [8, 32], strides = [1, 1]} : vector<8x128xf32> to vector<8x32xf32>
    %c8_i32_10 = arith.constant 8 : i32
    %35 = arith.muli %c1_i32, %c8_i32_10 : i32
    %36 = tpu.assume_multiple %35, 8 : i32
    %37 = arith.index_cast %36 : i32 to index
    %c0_11 = arith.constant 0 : index
    %38 = vector.load %arg0[%37, %c0_11] : memref<64x128xf32, #tpu.memory_space<vmem>>, vector<8x128xf32>
    %cst_12 = arith.constant dense<0.000000e+00> : vector<8x128xf32>
    %39 = tpu.matmul %34, %0, %cst_12 {dimension_numbers = #tpu.dot_dimension_numbers<[1], [0], [0], [1], [0, 0, 1, 1], [], []>} : vector<8x32xf32>, vector<32x128xf32>, vector<8x128xf32> -> vector<8x128xf32>
    %40 = arith.addf %38, %39 : vector<8x128xf32>
    %41 = arith.mulf %9, %40 : vector<8x128xf32>
    %42 = math.tanh %41 : vector<8x128xf32>
    %43 = arith.mulf %9, %42 : vector<8x128xf32>
    %44 = arith.addf %12, %43 : vector<8x128xf32>
    %c96_i32_13 = arith.constant 96 : i32
    %45 = tpu.dynamic_rotate %44 by %c96_i32_13 dim 1 : vector<8x128xf32>, i32 -> vector<8x128xf32>
    %c64_i32_14 = arith.constant 64 : i32
    %46 = tpu.dynamic_rotate %44 by %c64_i32_14 dim 1 : vector<8x128xf32>, i32 -> vector<8x128xf32>
    %c32_i32_15 = arith.constant 32 : i32
    %47 = tpu.dynamic_rotate %44 by %c32_i32_15 dim 1 : vector<8x128xf32>, i32 -> vector<8x128xf32>
    %48 = arith.mulf %45, %31 : vector<8x128xf32>
    %49 = arith.mulf %44, %46 : vector<8x128xf32>
    %50 = arith.addf %48, %49 : vector<8x128xf32>
    %51 = math.tanh %50 : vector<8x128xf32>
    %52 = arith.mulf %47, %51 : vector<8x128xf32>
    %c2_i32 = arith.constant 2 : i32
    %53 = vector.extract_strided_slice %52 {offsets = [0, 0], sizes = [8, 32], strides = [1, 1]} : vector<8x128xf32> to vector<8x32xf32>
    %c8_i32_16 = arith.constant 8 : i32
    %54 = arith.muli %c2_i32, %c8_i32_16 : i32
    %55 = tpu.assume_multiple %54, 8 : i32
    %56 = arith.index_cast %55 : i32 to index
    %c0_17 = arith.constant 0 : index
    %57 = vector.load %arg0[%56, %c0_17] : memref<64x128xf32, #tpu.memory_space<vmem>>, vector<8x128xf32>
    %cst_18 = arith.constant dense<0.000000e+00> : vector<8x128xf32>
    %58 = tpu.matmul %53, %0, %cst_18 {dimension_numbers = #tpu.dot_dimension_numbers<[1], [0], [0], [1], [0, 0, 1, 1], [], []>} : vector<8x32xf32>, vector<32x128xf32>, vector<8x128xf32> -> vector<8x128xf32>
    %59 = arith.addf %57, %58 : vector<8x128xf32>
    %60 = arith.mulf %9, %59 : vector<8x128xf32>
    %61 = math.tanh %60 : vector<8x128xf32>
    %62 = arith.mulf %9, %61 : vector<8x128xf32>
    %63 = arith.addf %12, %62 : vector<8x128xf32>
    %c96_i32_19 = arith.constant 96 : i32
    %64 = tpu.dynamic_rotate %63 by %c96_i32_19 dim 1 : vector<8x128xf32>, i32 -> vector<8x128xf32>
    %c64_i32_20 = arith.constant 64 : i32
    %65 = tpu.dynamic_rotate %63 by %c64_i32_20 dim 1 : vector<8x128xf32>, i32 -> vector<8x128xf32>
    %c32_i32_21 = arith.constant 32 : i32
    %66 = tpu.dynamic_rotate %63 by %c32_i32_21 dim 1 : vector<8x128xf32>, i32 -> vector<8x128xf32>
    %67 = arith.mulf %64, %50 : vector<8x128xf32>
    %68 = arith.mulf %63, %65 : vector<8x128xf32>
    %69 = arith.addf %67, %68 : vector<8x128xf32>
    %70 = math.tanh %69 : vector<8x128xf32>
    %71 = arith.mulf %66, %70 : vector<8x128xf32>
    %c3_i32 = arith.constant 3 : i32
    %72 = vector.extract_strided_slice %71 {offsets = [0, 0], sizes = [8, 32], strides = [1, 1]} : vector<8x128xf32> to vector<8x32xf32>
    %c8_i32_22 = arith.constant 8 : i32
    %73 = arith.muli %c3_i32, %c8_i32_22 : i32
    %74 = tpu.assume_multiple %73, 8 : i32
    %75 = arith.index_cast %74 : i32 to index
    %c0_23 = arith.constant 0 : index
    %76 = vector.load %arg0[%75, %c0_23] : memref<64x128xf32, #tpu.memory_space<vmem>>, vector<8x128xf32>
    %cst_24 = arith.constant dense<0.000000e+00> : vector<8x128xf32>
    %77 = tpu.matmul %72, %0, %cst_24 {dimension_numbers = #tpu.dot_dimension_numbers<[1], [0], [0], [1], [0, 0, 1, 1], [], []>} : vector<8x32xf32>, vector<32x128xf32>, vector<8x128xf32> -> vector<8x128xf32>
    %78 = arith.addf %76, %77 : vector<8x128xf32>
    %79 = arith.mulf %9, %78 : vector<8x128xf32>
    %80 = math.tanh %79 : vector<8x128xf32>
    %81 = arith.mulf %9, %80 : vector<8x128xf32>
    %82 = arith.addf %12, %81 : vector<8x128xf32>
    %c96_i32_25 = arith.constant 96 : i32
    %83 = tpu.dynamic_rotate %82 by %c96_i32_25 dim 1 : vector<8x128xf32>, i32 -> vector<8x128xf32>
    %c64_i32_26 = arith.constant 64 : i32
    %84 = tpu.dynamic_rotate %82 by %c64_i32_26 dim 1 : vector<8x128xf32>, i32 -> vector<8x128xf32>
    %c32_i32_27 = arith.constant 32 : i32
    %85 = tpu.dynamic_rotate %82 by %c32_i32_27 dim 1 : vector<8x128xf32>, i32 -> vector<8x128xf32>
    %86 = arith.mulf %83, %69 : vector<8x128xf32>
    %87 = arith.mulf %82, %84 : vector<8x128xf32>
    %88 = arith.addf %86, %87 : vector<8x128xf32>
    %89 = math.tanh %88 : vector<8x128xf32>
    %90 = arith.mulf %85, %89 : vector<8x128xf32>
    %c4_i32 = arith.constant 4 : i32
    %91 = vector.extract_strided_slice %90 {offsets = [0, 0], sizes = [8, 32], strides = [1, 1]} : vector<8x128xf32> to vector<8x32xf32>
    %c8_i32_28 = arith.constant 8 : i32
    %92 = arith.muli %c4_i32, %c8_i32_28 : i32
    %93 = tpu.assume_multiple %92, 8 : i32
    %94 = arith.index_cast %93 : i32 to index
    %c0_29 = arith.constant 0 : index
    %95 = vector.load %arg0[%94, %c0_29] : memref<64x128xf32, #tpu.memory_space<vmem>>, vector<8x128xf32>
    %cst_30 = arith.constant dense<0.000000e+00> : vector<8x128xf32>
    %96 = tpu.matmul %91, %0, %cst_30 {dimension_numbers = #tpu.dot_dimension_numbers<[1], [0], [0], [1], [0, 0, 1, 1], [], []>} : vector<8x32xf32>, vector<32x128xf32>, vector<8x128xf32> -> vector<8x128xf32>
    %97 = arith.addf %95, %96 : vector<8x128xf32>
    %98 = arith.mulf %9, %97 : vector<8x128xf32>
    %99 = math.tanh %98 : vector<8x128xf32>
    %100 = arith.mulf %9, %99 : vector<8x128xf32>
    %101 = arith.addf %12, %100 : vector<8x128xf32>
    %c96_i32_31 = arith.constant 96 : i32
    %102 = tpu.dynamic_rotate %101 by %c96_i32_31 dim 1 : vector<8x128xf32>, i32 -> vector<8x128xf32>
    %c64_i32_32 = arith.constant 64 : i32
    %103 = tpu.dynamic_rotate %101 by %c64_i32_32 dim 1 : vector<8x128xf32>, i32 -> vector<8x128xf32>
    %c32_i32_33 = arith.constant 32 : i32
    %104 = tpu.dynamic_rotate %101 by %c32_i32_33 dim 1 : vector<8x128xf32>, i32 -> vector<8x128xf32>
    %105 = arith.mulf %102, %88 : vector<8x128xf32>
    %106 = arith.mulf %101, %103 : vector<8x128xf32>
    %107 = arith.addf %105, %106 : vector<8x128xf32>
    %108 = math.tanh %107 : vector<8x128xf32>
    %109 = arith.mulf %104, %108 : vector<8x128xf32>
    %c5_i32 = arith.constant 5 : i32
    %110 = vector.extract_strided_slice %109 {offsets = [0, 0], sizes = [8, 32], strides = [1, 1]} : vector<8x128xf32> to vector<8x32xf32>
    %c8_i32_34 = arith.constant 8 : i32
    %111 = arith.muli %c5_i32, %c8_i32_34 : i32
    %112 = tpu.assume_multiple %111, 8 : i32
    %113 = arith.index_cast %112 : i32 to index
    %c0_35 = arith.constant 0 : index
    %114 = vector.load %arg0[%113, %c0_35] : memref<64x128xf32, #tpu.memory_space<vmem>>, vector<8x128xf32>
    %cst_36 = arith.constant dense<0.000000e+00> : vector<8x128xf32>
    %115 = tpu.matmul %110, %0, %cst_36 {dimension_numbers = #tpu.dot_dimension_numbers<[1], [0], [0], [1], [0, 0, 1, 1], [], []>} : vector<8x32xf32>, vector<32x128xf32>, vector<8x128xf32> -> vector<8x128xf32>
    %116 = arith.addf %114, %115 : vector<8x128xf32>
    %117 = arith.mulf %9, %116 : vector<8x128xf32>
    %118 = math.tanh %117 : vector<8x128xf32>
    %119 = arith.mulf %9, %118 : vector<8x128xf32>
    %120 = arith.addf %12, %119 : vector<8x128xf32>
    %c96_i32_37 = arith.constant 96 : i32
    %121 = tpu.dynamic_rotate %120 by %c96_i32_37 dim 1 : vector<8x128xf32>, i32 -> vector<8x128xf32>
    %c64_i32_38 = arith.constant 64 : i32
    %122 = tpu.dynamic_rotate %120 by %c64_i32_38 dim 1 : vector<8x128xf32>, i32 -> vector<8x128xf32>
    %c32_i32_39 = arith.constant 32 : i32
    %123 = tpu.dynamic_rotate %120 by %c32_i32_39 dim 1 : vector<8x128xf32>, i32 -> vector<8x128xf32>
    %124 = arith.mulf %121, %107 : vector<8x128xf32>
    %125 = arith.mulf %120, %122 : vector<8x128xf32>
    %126 = arith.addf %124, %125 : vector<8x128xf32>
    %127 = math.tanh %126 : vector<8x128xf32>
    %128 = arith.mulf %123, %127 : vector<8x128xf32>
    %c6_i32 = arith.constant 6 : i32
    %129 = vector.extract_strided_slice %128 {offsets = [0, 0], sizes = [8, 32], strides = [1, 1]} : vector<8x128xf32> to vector<8x32xf32>
    %c8_i32_40 = arith.constant 8 : i32
    %130 = arith.muli %c6_i32, %c8_i32_40 : i32
    %131 = tpu.assume_multiple %130, 8 : i32
    %132 = arith.index_cast %131 : i32 to index
    %c0_41 = arith.constant 0 : index
    %133 = vector.load %arg0[%132, %c0_41] : memref<64x128xf32, #tpu.memory_space<vmem>>, vector<8x128xf32>
    %cst_42 = arith.constant dense<0.000000e+00> : vector<8x128xf32>
    %134 = tpu.matmul %129, %0, %cst_42 {dimension_numbers = #tpu.dot_dimension_numbers<[1], [0], [0], [1], [0, 0, 1, 1], [], []>} : vector<8x32xf32>, vector<32x128xf32>, vector<8x128xf32> -> vector<8x128xf32>
    %135 = arith.addf %133, %134 : vector<8x128xf32>
    %136 = arith.mulf %9, %135 : vector<8x128xf32>
    %137 = math.tanh %136 : vector<8x128xf32>
    %138 = arith.mulf %9, %137 : vector<8x128xf32>
    %139 = arith.addf %12, %138 : vector<8x128xf32>
    %c96_i32_43 = arith.constant 96 : i32
    %140 = tpu.dynamic_rotate %139 by %c96_i32_43 dim 1 : vector<8x128xf32>, i32 -> vector<8x128xf32>
    %c64_i32_44 = arith.constant 64 : i32
    %141 = tpu.dynamic_rotate %139 by %c64_i32_44 dim 1 : vector<8x128xf32>, i32 -> vector<8x128xf32>
    %c32_i32_45 = arith.constant 32 : i32
    %142 = tpu.dynamic_rotate %139 by %c32_i32_45 dim 1 : vector<8x128xf32>, i32 -> vector<8x128xf32>
    %143 = arith.mulf %140, %126 : vector<8x128xf32>
    %144 = arith.mulf %139, %141 : vector<8x128xf32>
    %145 = arith.addf %143, %144 : vector<8x128xf32>
    %146 = math.tanh %145 : vector<8x128xf32>
    %147 = arith.mulf %142, %146 : vector<8x128xf32>
    %c7_i32 = arith.constant 7 : i32
    %148 = vector.extract_strided_slice %147 {offsets = [0, 0], sizes = [8, 32], strides = [1, 1]} : vector<8x128xf32> to vector<8x32xf32>
    %c8_i32_46 = arith.constant 8 : i32
    %149 = arith.muli %c7_i32, %c8_i32_46 : i32
    %150 = tpu.assume_multiple %149, 8 : i32
    %151 = arith.index_cast %150 : i32 to index
    %c0_47 = arith.constant 0 : index
    %152 = vector.load %arg0[%151, %c0_47] : memref<64x128xf32, #tpu.memory_space<vmem>>, vector<8x128xf32>
    %cst_48 = arith.constant dense<0.000000e+00> : vector<8x128xf32>
    %153 = tpu.matmul %148, %0, %cst_48 {dimension_numbers = #tpu.dot_dimension_numbers<[1], [0], [0], [1], [0, 0, 1, 1], [], []>} : vector<8x32xf32>, vector<32x128xf32>, vector<8x128xf32> -> vector<8x128xf32>
    %154 = arith.addf %152, %153 : vector<8x128xf32>
    %155 = arith.mulf %9, %154 : vector<8x128xf32>
    %156 = math.tanh %155 : vector<8x128xf32>
    %157 = arith.mulf %9, %156 : vector<8x128xf32>
    %158 = arith.addf %12, %157 : vector<8x128xf32>
    %c96_i32_49 = arith.constant 96 : i32
    %159 = tpu.dynamic_rotate %158 by %c96_i32_49 dim 1 : vector<8x128xf32>, i32 -> vector<8x128xf32>
    %c64_i32_50 = arith.constant 64 : i32
    %160 = tpu.dynamic_rotate %158 by %c64_i32_50 dim 1 : vector<8x128xf32>, i32 -> vector<8x128xf32>
    %c32_i32_51 = arith.constant 32 : i32
    %161 = tpu.dynamic_rotate %158 by %c32_i32_51 dim 1 : vector<8x128xf32>, i32 -> vector<8x128xf32>
    %162 = arith.mulf %159, %145 : vector<8x128xf32>
    %163 = arith.mulf %158, %160 : vector<8x128xf32>
    %164 = arith.addf %162, %163 : vector<8x128xf32>
    %165 = math.tanh %164 : vector<8x128xf32>
    %166 = arith.mulf %161, %165 : vector<8x128xf32>
    %c8_i32_52 = arith.constant 8 : i32
    %c0_53 = arith.constant 0 : index
    %c0_54 = arith.constant 0 : index
    %167 = vector.load %arg2[%c0_53, %c0_54] : memref<8x128xf32, #tpu.memory_space<vmem>>, vector<8x128xf32>
    tpu.vector_store %arg2[%c0_53, %c0_54], %166 {strides = array<i32>} : memref<8x128xf32, #tpu.memory_space<vmem>>, vector<8x128xf32>,
    return
  }
}

</mosaic_0001>

<llo_original>
// kernel: lstm_classifier_forward.1
$region0: #{lstm_classifier_forward.1}
  #allocation0 [shape = 'u32[]', space=smem, size = 0x4, offset = 0x4, fixed_abs, tag = 'smem constant byte address 0x4 - core index']
  #allocation1 [shape = 'u32[144,128]{1,0:T(1,128)}', space=vmem, size = 0x12000, scoped, tag = 'internal scratch']
  %s0 = inlined_call_operand.vmem [shape: f32[64,128], index: 0, kind: input, shape index: {}]
  %s1 = inlined_call_operand.vmem [shape: f32[32,128], index: 1, kind: input, shape index: {}]
  %s2 = inlined_call_operand.vmem [shape: f32[8,128], index: 2, kind: output, shape index: {}]
  %s3 = sld [smem:[#allocation0]]
  $region18: #{lstm_classifier_forward.1} parent=0
    _
  %s5 = ssub.s32 1, %s3
  %s6 = scalar_select 0, %s5, %s3
  // Predicated region
  $region2: #{lstm_classifier_forward.1} parent=0 // pred_check
    _
  $region3: #{lstm_classifier_forward.1} parent=0 // pred_check_branch
    %8 = sbr.rel (0) target = $region5
  $region4: #{lstm_classifier_forward.1} parent=0 // pred_region
    _
  $region5: #{lstm_classifier_forward.1} parent=0 // pred_fallthru
    _
  // Predicated region
  $region6: #{lstm_classifier_forward.1} parent=0 // pred_check
    _
  $region7: #{lstm_classifier_forward.1} parent=0 // pred_check_branch
    %10 = sbr.rel (0) target = $region9
  $region8: #{lstm_classifier_forward.1} parent=0 // pred_region
    _
  $region9: #{lstm_classifier_forward.1} parent=0 // pred_fallthru
    _
  %v11 = vld [vmem:[%s1] sm:$0xff]
  %v12 = vld [vmem:[%s1 + $0x8] sm:$0xff]
  %v13 = vld [vmem:[%s1 + $0x10] sm:$0xff]
  %v14 = vld [vmem:[%s1 + $0x18] sm:$0xff]
  %v15 = vlaneseq
  %v16 = vand.u32 %v15, 127
  %vm17 = vcmp.ge.s32.totalorder %v16, 64
  %vm18 = vcmp.lt.s32.totalorder %v16, 96
  %vm19 = vmand %vm17, %vm18
  %v20 = vsel %vm19, 1.0, 0.5
  %v21 = vsel %vm19, 0.0, 0.5
  %v22 = vld [vmem:[%s0] sm:$0xff]
  %vm23 = vcmask 261120
  %v25 = vsel %vm23, 0.0, 0
  %27 = vmatprep.subr.mxu0 0.0
  %28 = vmatpush1.msra.mxu0 %v11
  %29 = vmatprep.subr.mxu0 0.0
  %30 = vmatpush1.msra.mxu0 %v12
  %31 = vmatprep.subr.mxu0 0.0
  %32 = vmatpush1.msra.mxu0 %v13
  %33 = vmatprep.subr.mxu0 0.0
  %34 = vmatpush1.msra.mxu0 %v14
  %35 = vmatprep.subr.mxu0 0.0
  %36 = vmatpush1.msra.mxu0 0.0
  %37 = vmatprep.subr.mxu0 0.0
  %38 = vmatpush1.msra.mxu0 0.0
  %39 = vmatprep.subr.mxu0 0.0
  %40 = vmatpush1.msra.mxu0 0.0
  %41 = vmatprep.subr.mxu0 0.0
  %42 = vmatpush1.msra.mxu0 0.0
  %43 = vmatprep.subr.mxu0 0.0
  %44 = vmatpush1.msra.mxu0 0.0
  %45 = vmatprep.subr.mxu0 0.0
  %46 = vmatpush1.msra.mxu0 0.0
  %47 = vmatprep.subr.mxu0 0.0
  %48 = vmatpush1.msra.mxu0 0.0
  %49 = vmatprep.subr.mxu0 0.0
  %50 = vmatpush1.msra.mxu0 0.0
  %51 = vmatprep.subr.mxu0 0.0
  %52 = vmatpush1.msra.mxu0 0.0
  %53 = vmatprep.subr.mxu0 0.0
  %54 = vmatpush1.msra.mxu0 0.0
  %55 = vmatprep.subr.mxu0 0.0
  %56 = vmatpush1.msra.mxu0 0.0
  %57 = vmatprep.subr.mxu0 0.0
  %58 = vmatpush1.msra.mxu0 0.0
  %59 = vmatprep.subr.mxu0 0.0
  %60 = vmatpush1.msra.mxu0 0.0
  %61 = vmatprep.subr.mxu0 0.0
  %62 = vmatpush1.msra.mxu0 0.0
  %63 = vmatprep.subr.mxu0 0.0
  %64 = vmatpush1.msra.mxu0 0.0
  %65 = vmatprep.subr.mxu0 0.0
  %66 = vmatpush1.msra.mxu0 0.0
  %67 = vmatprep.subr.mxu0 0.0
  %68 = vmatpush1.msra.mxu0 0.0
  %69 = vmatprep.subr.mxu0 0.0
  %70 = vmatpush1.msra.mxu0 0.0
  %71 = vmatprep.subr.mxu0 0.0
  %72 = vmatpush1.msra.mxu0 0.0
  %73 = vmatprep.subr.mxu0 0.0
  %74 = vmatpush1.msra.mxu0 0.0
  %75 = vmatprep.subr.mxu0 0.0
  %76 = vmatpush1.msra.mxu0 0.0
  %77 = vmatprep.subr.mxu0 0.0
  %78 = vmatpush1.msra.mxu0 0.0
  %79 = vmatprep.subr.mxu0 0.0
  %80 = vmatpush1.msra.mxu0 0.0
  %81 = vmatprep.subr.mxu0 0.0
  %82 = vmatpush1.msra.mxu0 0.0
  %83 = vmatprep.subr.mxu0 0.0
  %84 = vmatpush1.msra.mxu0 0.0
  %85 = vmatprep.subr.mxu0 0.0
  %86 = vmatpush1.msra.mxu0 0.0
  %87 = vmatprep.subr.mxu0 0.0
  %88 = vmatpush1.msra.mxu0 0.0
  %89 = vmatprep.subr.mxu0 0.0
  %90 = vmatpush1.msra.mxu0 0.0
  %91 = vmatprep.mubr.f32.mxu0 0.0
  %92 = vmatmul.mubr.f32.gmra.mrb[0].mxu0 %v25
  %v93 = vpop.f32.mrb[0].mxu0
  %v94 = vadd.f32 0.0, %v93
  %v95 = vpop.f32.mrb[0].mxu0
  %96 = vdwg.mxu0
  %v97 = vadd.f32 %v22, %v94
  %v98 = vmul.f32 %v20, %v97
  %v99 = vtanh.pop %v98
  %v100 = vmul.f32 %v20, %v99
  %v101 = vadd.f32 %v21, %v100
  %102 = vrot.lane.b32.xlu0 %v101, 96
  %v103 = vpop.permute.xlu0 %102
  %104 = vrot.lane.b32.xlu0 %v101, 64
  %v105 = vpop.permute.xlu0 %104
  %106 = vrot.lane.b32.xlu0 %v101, 32
  %v107 = vpop.permute.xlu0 %106
  %v108 = vmul.f32 %v103, 0.0
  %v109 = vmul.f32 %v101, %v105
  %v110 = vadd.f32 %v108, %v109
  %v111 = vtanh.pop %v110
  %v112 = vmul.f32 %v107, %v111
  %s113 = scalar_lea.vmem %s0, 8
  %v114 = vld [vmem:[%s113] sm:$0xff]
  %v116 = vsel %vm23, %v112, 0
  %118 = vmatprep.subr.mxu0 0.0
  %119 = vmatpush1.msra.mxu0 %v11
  %120 = vmatprep.subr.mxu0 0.0
  %121 = vmatpush1.msra.mxu0 %v12
  %122 = vmatprep.subr.mxu0 0.0
  %123 = vmatpush1.msra.mxu0 %v13
  %124 = vmatprep.subr.mxu0 0.0
  %125 = vmatpush1.msra.mxu0 %v14
  %126 = vmatprep.subr.mxu0 0.0
  %127 = vmatpush1.msra.mxu0 0.0
  %128 = vmatprep.subr.mxu0 0.0
  %129 = vmatpush1.msra.mxu0 0.0
  %130 = vmatprep.subr.mxu0 0.0
  %131 = vmatpush1.msra.mxu0 0.0
  %132 = vmatprep.subr.mxu0 0.0
  %133 = vmatpush1.msra.mxu0 0.0
  %134 = vmatprep.subr.mxu0 0.0
  %135 = vmatpush1.msra.mxu0 0.0
  %136 = vmatprep.subr.mxu0 0.0
  %137 = vmatpush1.msra.mxu0 0.0
  %138 = vmatprep.subr.mxu0 0.0
  %139 = vmatpush1.msra.mxu0 0.0
  %140 = vmatprep.subr.mxu0 0.0
  %141 = vmatpush1.msra.mxu0 0.0
  %142 = vmatprep.subr.mxu0 0.0
  %143 = vmatpush1.msra.mxu0 0.0
  %144 = vmatprep.subr.mxu0 0.0
  %145 = vmatpush1.msra.mxu0 0.0
  %146 = vmatprep.subr.mxu0 0.0
  %147 = vmatpush1.msra.mxu0 0.0
  %148 = vmatprep.subr.mxu0 0.0
  %149 = vmatpush1.msra.mxu0 0.0
  %150 = vmatprep.subr.mxu0 0.0
  %151 = vmatpush1.msra.mxu0 0.0
  %152 = vmatprep.subr.mxu0 0.0
  %153 = vmatpush1.msra.mxu0 0.0
  %154 = vmatprep.subr.mxu0 0.0
  %155 = vmatpush1.msra.mxu0 0.0
  %156 = vmatprep.subr.mxu0 0.0
  %157 = vmatpush1.msra.mxu0 0.0
  %158 = vmatprep.subr.mxu0 0.0
  %159 = vmatpush1.msra.mxu0 0.0
  %160 = vmatprep.subr.mxu0 0.0
  %161 = vmatpush1.msra.mxu0 0.0
  %162 = vmatprep.subr.mxu0 0.0
  %163 = vmatpush1.msra.mxu0 0.0
  %164 = vmatprep.subr.mxu0 0.0
  %165 = vmatpush1.msra.mxu0 0.0
  %166 = vmatprep.subr.mxu0 0.0
  %167 = vmatpush1.msra.mxu0 0.0
  %168 = vmatprep.subr.mxu0 0.0
  %169 = vmatpush1.msra.mxu0 0.0
  %170 = vmatprep.subr.mxu0 0.0
  %171 = vmatpush1.msra.mxu0 0.0
  %172 = vmatprep.subr.mxu0 0.0
  %173 = vmatpush1.msra.mxu0 0.0
  %174 = vmatprep.subr.mxu0 0.0
  %175 = vmatpush1.msra.mxu0 0.0
  %176 = vmatprep.subr.mxu0 0.0
  %177 = vmatpush1.msra.mxu0 0.0
  %178 = vmatprep.subr.mxu0 0.0
  %179 = vmatpush1.msra.mxu0 0.0
  %180 = vmatprep.subr.mxu0 0.0
  %181 = vmatpush1.msra.mxu0 0.0
  %182 = vmatprep.mubr.f32.mxu0 0.0
  %183 = vmatmul.mubr.f32.gmra.mrb[0].mxu0 %v116
  %v184 = vpop.f32.mrb[0].mxu0
  %v185 = vadd.f32 0.0, %v184
  %v186 = vpop.f32.mrb[0].mxu0
  %187 = vdwg.mxu0
  %v188 = vadd.f32 %v114, %v185
  %v189 = vmul.f32 %v20, %v188
  %v190 = vtanh.pop %v189
  %v191 = vmul.f32 %v20, %v190
  %v192 = vadd.f32 %v21, %v191
  %193 = vrot.lane.b32.xlu0 %v192, 96
  %v194 = vpop.permute.xlu0 %193
  %195 = vrot.lane.b32.xlu0 %v192, 64
  %v196 = vpop.permute.xlu0 %195
  %197 = vrot.lane.b32.xlu0 %v192, 32
  %v198 = vpop.permute.xlu0 %197
  %v199 = vmul.f32 %v194, %v110
  %v200 = vmul.f32 %v192, %v196
  %v201 = vadd.f32 %v199, %v200
  %v202 = vtanh.pop %v201
  %v203 = vmul.f32 %v198, %v202
  %s204 = scalar_lea.vmem %s0, 16
  %v205 = vld [vmem:[%s204] sm:$0xff]
  %v207 = vsel %vm23, %v203, 0
  %209 = vmatprep.subr.mxu0 0.0
  %210 = vmatpush1.msra.mxu0 %v11
  %211 = vmatprep.subr.mxu0 0.0
  %212 = vmatpush1.msra.mxu0 %v12
  %213 = vmatprep.subr.mxu0 0.0
  %214 = vmatpush1.msra.mxu0 %v13
  %215 = vmatprep.subr.mxu0 0.0
  %216 = vmatpush1.msra.mxu0 %v14
  %217 = vmatprep.subr.mxu0 0.0
  %218 = vmatpush1.msra.mxu0 0.0
  %219 = vmatprep.subr.mxu0 0.0
  %220 = vmatpush1.msra.mxu0 0.0
  %221 = vmatprep.subr.mxu0 0.0
  %222 = vmatpush1.msra.mxu0 0.0
  %223 = vmatprep.subr.mxu0 0.0
  %224 = vmatpush1.msra.mxu0 0.0
  %225 = vmatprep.subr.mxu0 0.0
  %226 = vmatpush1.msra.mxu0 0.0
  %227 = vmatprep.subr.mxu0 0.0
  %228 = vmatpush1.msra.mxu0 0.0
  %229 = vmatprep.subr.mxu0 0.0
  %230 = vmatpush1.msra.mxu0 0.0
  %231 = vmatprep.subr.mxu0 0.0
  %232 = vmatpush1.msra.mxu0 0.0
  %233 = vmatprep.subr.mxu0 0.0
  %234 = vmatpush1.msra.mxu0 0.0
  %235 = vmatprep.subr.mxu0 0.0
  %236 = vmatpush1.msra.mxu0 0.0
  %237 = vmatprep.subr.mxu0 0.0
  %238 = vmatpush1.msra.mxu0 0.0
  %239 = vmatprep.subr.mxu0 0.0
  %240 = vmatpush1.msra.mxu0 0.0
  %241 = vmatprep.subr.mxu0 0.0
  %242 = vmatpush1.msra.mxu0 0.0
  %243 = vmatprep.subr.mxu0 0.0
  %244 = vmatpush1.msra.mxu0 0.0
  %245 = vmatprep.subr.mxu0 0.0
  %246 = vmatpush1.msra.mxu0 0.0
  %247 = vmatprep.subr.mxu0 0.0
  %248 = vmatpush1.msra.mxu0 0.0
  %249 = vmatprep.subr.mxu0 0.0
  %250 = vmatpush1.msra.mxu0 0.0
  %251 = vmatprep.subr.mxu0 0.0
  %252 = vmatpush1.msra.mxu0 0.0
  %253 = vmatprep.subr.mxu0 0.0
  %254 = vmatpush1.msra.mxu0 0.0
  %255 = vmatprep.subr.mxu0 0.0
  %256 = vmatpush1.msra.mxu0 0.0
  %257 = vmatprep.subr.mxu0 0.0
  %258 = vmatpush1.msra.mxu0 0.0
  %259 = vmatprep.subr.mxu0 0.0
  %260 = vmatpush1.msra.mxu0 0.0
  %261 = vmatprep.subr.mxu0 0.0
  %262 = vmatpush1.msra.mxu0 0.0
  %263 = vmatprep.subr.mxu0 0.0
  %264 = vmatpush1.msra.mxu0 0.0
  %265 = vmatprep.subr.mxu0 0.0
  %266 = vmatpush1.msra.mxu0 0.0
  %267 = vmatprep.subr.mxu0 0.0
  %268 = vmatpush1.msra.mxu0 0.0
  %269 = vmatprep.subr.mxu0 0.0
  %270 = vmatpush1.msra.mxu0 0.0
  %271 = vmatprep.subr.mxu0 0.0
  %272 = vmatpush1.msra.mxu0 0.0
  %273 = vmatprep.mubr.f32.mxu0 0.0
  %274 = vmatmul.mubr.f32.gmra.mrb[0].mxu0 %v207
  %v275 = vpop.f32.mrb[0].mxu0
  %v276 = vadd.f32 0.0, %v275
  %v277 = vpop.f32.mrb[0].mxu0
  %278 = vdwg.mxu0
  %v279 = vadd.f32 %v205, %v276
  %v280 = vmul.f32 %v20, %v279
  %v281 = vtanh.pop %v280
  %v282 = vmul.f32 %v20, %v281
  %v283 = vadd.f32 %v21, %v282
  %284 = vrot.lane.b32.xlu0 %v283, 96
  %v285 = vpop.permute.xlu0 %284
  %286 = vrot.lane.b32.xlu0 %v283, 64
  %v287 = vpop.permute.xlu0 %286
  %288 = vrot.lane.b32.xlu0 %v283, 32
  %v289 = vpop.permute.xlu0 %288
  %v290 = vmul.f32 %v285, %v201
  %v291 = vmul.f32 %v283, %v287
  %v292 = vadd.f32 %v290, %v291
  %v293 = vtanh.pop %v292
  %v294 = vmul.f32 %v289, %v293
  %s295 = scalar_lea.vmem %s0, 24
  %v296 = vld [vmem:[%s295] sm:$0xff]
  %v298 = vsel %vm23, %v294, 0
  %300 = vmatprep.subr.mxu0 0.0
  %301 = vmatpush1.msra.mxu0 %v11
  %302 = vmatprep.subr.mxu0 0.0
  %303 = vmatpush1.msra.mxu0 %v12
  %304 = vmatprep.subr.mxu0 0.0
  %305 = vmatpush1.msra.mxu0 %v13
  %306 = vmatprep.subr.mxu0 0.0
  %307 = vmatpush1.msra.mxu0 %v14
  %308 = vmatprep.subr.mxu0 0.0
  %309 = vmatpush1.msra.mxu0 0.0
  %310 = vmatprep.subr.mxu0 0.0
  %311 = vmatpush1.msra.mxu0 0.0
  %312 = vmatprep.subr.mxu0 0.0
  %313 = vmatpush1.msra.mxu0 0.0
  %314 = vmatprep.subr.mxu0 0.0
  %315 = vmatpush1.msra.mxu0 0.0
  %316 = vmatprep.subr.mxu0 0.0
  %317 = vmatpush1.msra.mxu0 0.0
  %318 = vmatprep.subr.mxu0 0.0
  %319 = vmatpush1.msra.mxu0 0.0
  %320 = vmatprep.subr.mxu0 0.0
  %321 = vmatpush1.msra.mxu0 0.0
  %322 = vmatprep.subr.mxu0 0.0
  %323 = vmatpush1.msra.mxu0 0.0
  %324 = vmatprep.subr.mxu0 0.0
  %325 = vmatpush1.msra.mxu0 0.0
  %326 = vmatprep.subr.mxu0 0.0
  %327 = vmatpush1.msra.mxu0 0.0
  %328 = vmatprep.subr.mxu0 0.0
  %329 = vmatpush1.msra.mxu0 0.0
  %330 = vmatprep.subr.mxu0 0.0
  %331 = vmatpush1.msra.mxu0 0.0
  %332 = vmatprep.subr.mxu0 0.0
  %333 = vmatpush1.msra.mxu0 0.0
  %334 = vmatprep.subr.mxu0 0.0
  %335 = vmatpush1.msra.mxu0 0.0
  %336 = vmatprep.subr.mxu0 0.0
  %337 = vmatpush1.msra.mxu0 0.0
  %338 = vmatprep.subr.mxu0 0.0
  %339 = vmatpush1.msra.mxu0 0.0
  %340 = vmatprep.subr.mxu0 0.0
  %341 = vmatpush1.msra.mxu0 0.0
  %342 = vmatprep.subr.mxu0 0.0
  %343 = vmatpush1.msra.mxu0 0.0
  %344 = vmatprep.subr.mxu0 0.0
  %345 = vmatpush1.msra.mxu0 0.0
  %346 = vmatprep.subr.mxu0 0.0
  %347 = vmatpush1.msra.mxu0 0.0
  %348 = vmatprep.subr.mxu0 0.0
  %349 = vmatpush1.msra.mxu0 0.0
  %350 = vmatprep.subr.mxu0 0.0
  %351 = vmatpush1.msra.mxu0 0.0
  %352 = vmatprep.subr.mxu0 0.0
  %353 = vmatpush1.msra.mxu0 0.0
  %354 = vmatprep.subr.mxu0 0.0
  %355 = vmatpush1.msra.mxu0 0.0
  %356 = vmatprep.subr.mxu0 0.0
  %357 = vmatpush1.msra.mxu0 0.0
  %358 = vmatprep.subr.mxu0 0.0
  %359 = vmatpush1.msra.mxu0 0.0
  %360 = vmatprep.subr.mxu0 0.0
  %361 = vmatpush1.msra.mxu0 0.0
  %362 = vmatprep.subr.mxu0 0.0
  %363 = vmatpush1.msra.mxu0 0.0
  %364 = vmatprep.mubr.f32.mxu0 0.0
  %365 = vmatmul.mubr.f32.gmra.mrb[0].mxu0 %v298
  %v366 = vpop.f32.mrb[0].mxu0
  %v367 = vadd.f32 0.0, %v366
  %v368 = vpop.f32.mrb[0].mxu0
  %369 = vdwg.mxu0
  %v370 = vadd.f32 %v296, %v367
  %v371 = vmul.f32 %v20, %v370
  %v372 = vtanh.pop %v371
  %v373 = vmul.f32 %v20, %v372
  %v374 = vadd.f32 %v21, %v373
  %375 = vrot.lane.b32.xlu0 %v374, 96
  %v376 = vpop.permute.xlu0 %375
  %377 = vrot.lane.b32.xlu0 %v374, 64
  %v378 = vpop.permute.xlu0 %377
  %379 = vrot.lane.b32.xlu0 %v374, 32
  %v380 = vpop.permute.xlu0 %379
  %v381 = vmul.f32 %v376, %v292
  %v382 = vmul.f32 %v374, %v378
  %v383 = vadd.f32 %v381, %v382
  %v384 = vtanh.pop %v383
  %v385 = vmul.f32 %v380, %v384
  %s386 = scalar_lea.vmem %s0, 32
  %v387 = vld [vmem:[%s386] sm:$0xff]
  %v389 = vsel %vm23, %v385, 0
  %391 = vmatprep.subr.mxu0 0.0
  %392 = vmatpush1.msra.mxu0 %v11
  %393 = vmatprep.subr.mxu0 0.0
  %394 = vmatpush1.msra.mxu0 %v12
  %395 = vmatprep.subr.mxu0 0.0
  %396 = vmatpush1.msra.mxu0 %v13
  %397 = vmatprep.subr.mxu0 0.0
  %398 = vmatpush1.msra.mxu0 %v14
  %399 = vmatprep.subr.mxu0 0.0
  %400 = vmatpush1.msra.mxu0 0.0
  %401 = vmatprep.subr.mxu0 0.0
  %402 = vmatpush1.msra.mxu0 0.0
  %403 = vmatprep.subr.mxu0 0.0
  %404 = vmatpush1.msra.mxu0 0.0
  %405 = vmatprep.subr.mxu0 0.0
  %406 = vmatpush1.msra.mxu0 0.0
  %407 = vmatprep.subr.mxu0 0.0
  %408 = vmatpush1.msra.mxu0 0.0
  %409 = vmatprep.subr.mxu0 0.0
  %410 = vmatpush1.msra.mxu0 0.0
  %411 = vmatprep.subr.mxu0 0.0
  %412 = vmatpush1.msra.mxu0 0.0
  %413 = vmatprep.subr.mxu0 0.0
  %414 = vmatpush1.msra.mxu0 0.0
  %415 = vmatprep.subr.mxu0 0.0
  %416 = vmatpush1.msra.mxu0 0.0
  %417 = vmatprep.subr.mxu0 0.0
  %418 = vmatpush1.msra.mxu0 0.0
  %419 = vmatprep.subr.mxu0 0.0
  %420 = vmatpush1.msra.mxu0 0.0
  %421 = vmatprep.subr.mxu0 0.0
  %422 = vmatpush1.msra.mxu0 0.0
  %423 = vmatprep.subr.mxu0 0.0
  %424 = vmatpush1.msra.mxu0 0.0
  %425 = vmatprep.subr.mxu0 0.0
  %426 = vmatpush1.msra.mxu0 0.0
  %427 = vmatprep.subr.mxu0 0.0
  %428 = vmatpush1.msra.mxu0 0.0
  %429 = vmatprep.subr.mxu0 0.0
  %430 = vmatpush1.msra.mxu0 0.0
  %431 = vmatprep.subr.mxu0 0.0
  %432 = vmatpush1.msra.mxu0 0.0
  %433 = vmatprep.subr.mxu0 0.0
  %434 = vmatpush1.msra.mxu0 0.0
  %435 = vmatprep.subr.mxu0 0.0
  %436 = vmatpush1.msra.mxu0 0.0
  %437 = vmatprep.subr.mxu0 0.0
  %438 = vmatpush1.msra.mxu0 0.0
  %439 = vmatprep.subr.mxu0 0.0
  %440 = vmatpush1.msra.mxu0 0.0
  %441 = vmatprep.subr.mxu0 0.0
  %442 = vmatpush1.msra.mxu0 0.0
  %443 = vmatprep.subr.mxu0 0.0
  %444 = vmatpush1.msra.mxu0 0.0
  %445 = vmatprep.subr.mxu0 0.0
  %446 = vmatpush1.msra.mxu0 0.0
  %447 = vmatprep.subr.mxu0 0.0
  %448 = vmatpush1.msra.mxu0 0.0
  %449 = vmatprep.subr.mxu0 0.0
  %450 = vmatpush1.msra.mxu0 0.0
  %451 = vmatprep.subr.mxu0 0.0
  %452 = vmatpush1.msra.mxu0 0.0
  %453 = vmatprep.subr.mxu0 0.0
  %454 = vmatpush1.msra.mxu0 0.0
  %455 = vmatprep.mubr.f32.mxu0 0.0
  %456 = vmatmul.mubr.f32.gmra.mrb[0].mxu0 %v389
  %v457 = vpop.f32.mrb[0].mxu0
  %v458 = vadd.f32 0.0, %v457
  %v459 = vpop.f32.mrb[0].mxu0
  %460 = vdwg.mxu0
  %v461 = vadd.f32 %v387, %v458
  %v462 = vmul.f32 %v20, %v461
  %v463 = vtanh.pop %v462
  %v464 = vmul.f32 %v20, %v463
  %v465 = vadd.f32 %v21, %v464
  %466 = vrot.lane.b32.xlu0 %v465, 96
  %v467 = vpop.permute.xlu0 %466
  %468 = vrot.lane.b32.xlu0 %v465, 64
  %v469 = vpop.permute.xlu0 %468
  %470 = vrot.lane.b32.xlu0 %v465, 32
  %v471 = vpop.permute.xlu0 %470
  %v472 = vmul.f32 %v467, %v383
  %v473 = vmul.f32 %v465, %v469
  %v474 = vadd.f32 %v472, %v473
  %v475 = vtanh.pop %v474
  %v476 = vmul.f32 %v471, %v475
  %s477 = scalar_lea.vmem %s0, 40
  %v478 = vld [vmem:[%s477] sm:$0xff]
  %v480 = vsel %vm23, %v476, 0
  %482 = vmatprep.subr.mxu0 0.0
  %483 = vmatpush1.msra.mxu0 %v11
  %484 = vmatprep.subr.mxu0 0.0
  %485 = vmatpush1.msra.mxu0 %v12
  %486 = vmatprep.subr.mxu0 0.0
  %487 = vmatpush1.msra.mxu0 %v13
  %488 = vmatprep.subr.mxu0 0.0
  %489 = vmatpush1.msra.mxu0 %v14
  %490 = vmatprep.subr.mxu0 0.0
  %491 = vmatpush1.msra.mxu0 0.0
  %492 = vmatprep.subr.mxu0 0.0
  %493 = vmatpush1.msra.mxu0 0.0
  %494 = vmatprep.subr.mxu0 0.0
  %495 = vmatpush1.msra.mxu0 0.0
  %496 = vmatprep.subr.mxu0 0.0
  %497 = vmatpush1.msra.mxu0 0.0
  %498 = vmatprep.subr.mxu0 0.0
  %499 = vmatpush1.msra.mxu0 0.0
  %500 = vmatprep.subr.mxu0 0.0
  %501 = vmatpush1.msra.mxu0 0.0
  %502 = vmatprep.subr.mxu0 0.0
  %503 = vmatpush1.msra.mxu0 0.0
  %504 = vmatprep.subr.mxu0 0.0
  %505 = vmatpush1.msra.mxu0 0.0
  %506 = vmatprep.subr.mxu0 0.0
  %507 = vmatpush1.msra.mxu0 0.0
  %508 = vmatprep.subr.mxu0 0.0
  %509 = vmatpush1.msra.mxu0 0.0
  %510 = vmatprep.subr.mxu0 0.0
  %511 = vmatpush1.msra.mxu0 0.0
  %512 = vmatprep.subr.mxu0 0.0
  %513 = vmatpush1.msra.mxu0 0.0
  %514 = vmatprep.subr.mxu0 0.0
  %515 = vmatpush1.msra.mxu0 0.0
  %516 = vmatprep.subr.mxu0 0.0
  %517 = vmatpush1.msra.mxu0 0.0
  %518 = vmatprep.subr.mxu0 0.0
  %519 = vmatpush1.msra.mxu0 0.0
  %520 = vmatprep.subr.mxu0 0.0
  %521 = vmatpush1.msra.mxu0 0.0
  %522 = vmatprep.subr.mxu0 0.0
  %523 = vmatpush1.msra.mxu0 0.0
  %524 = vmatprep.subr.mxu0 0.0
  %525 = vmatpush1.msra.mxu0 0.0
  %526 = vmatprep.subr.mxu0 0.0
  %527 = vmatpush1.msra.mxu0 0.0
  %528 = vmatprep.subr.mxu0 0.0
  %529 = vmatpush1.msra.mxu0 0.0
  %530 = vmatprep.subr.mxu0 0.0
  %531 = vmatpush1.msra.mxu0 0.0
  %532 = vmatprep.subr.mxu0 0.0
  %533 = vmatpush1.msra.mxu0 0.0
  %534 = vmatprep.subr.mxu0 0.0
  %535 = vmatpush1.msra.mxu0 0.0
  %536 = vmatprep.subr.mxu0 0.0
  %537 = vmatpush1.msra.mxu0 0.0
  %538 = vmatprep.subr.mxu0 0.0
  %539 = vmatpush1.msra.mxu0 0.0
  %540 = vmatprep.subr.mxu0 0.0
  %541 = vmatpush1.msra.mxu0 0.0
  %542 = vmatprep.subr.mxu0 0.0
  %543 = vmatpush1.msra.mxu0 0.0
  %544 = vmatprep.subr.mxu0 0.0
  %545 = vmatpush1.msra.mxu0 0.0
  %546 = vmatprep.mubr.f32.mxu0 0.0
  %547 = vmatmul.mubr.f32.gmra.mrb[0].mxu0 %v480
  %v548 = vpop.f32.mrb[0].mxu0
  %v549 = vadd.f32 0.0, %v548
  %v550 = vpop.f32.mrb[0].mxu0
  %551 = vdwg.mxu0
  %v552 = vadd.f32 %v478, %v549
  %v553 = vmul.f32 %v20, %v552
  %v554 = vtanh.pop %v553
  %v555 = vmul.f32 %v20, %v554
  %v556 = vadd.f32 %v21, %v555
  %557 = vrot.lane.b32.xlu0 %v556, 96
  %v558 = vpop.permute.xlu0 %557
  %559 = vrot.lane.b32.xlu0 %v556, 64
  %v560 = vpop.permute.xlu0 %559
  %561 = vrot.lane.b32.xlu0 %v556, 32
  %v562 = vpop.permute.xlu0 %561
  %v563 = vmul.f32 %v558, %v474
  %v564 = vmul.f32 %v556, %v560
  %v565 = vadd.f32 %v563, %v564
  %v566 = vtanh.pop %v565
  %v567 = vmul.f32 %v562, %v566
  %s568 = scalar_lea.vmem %s0, 48
  %v569 = vld [vmem:[%s568] sm:$0xff]
  %v571 = vsel %vm23, %v567, 0
  %573 = vmatprep.subr.mxu0 0.0
  %574 = vmatpush1.msra.mxu0 %v11
  %575 = vmatprep.subr.mxu0 0.0
  %576 = vmatpush1.msra.mxu0 %v12
  %577 = vmatprep.subr.mxu0 0.0
  %578 = vmatpush1.msra.mxu0 %v13
  %579 = vmatprep.subr.mxu0 0.0
  %580 = vmatpush1.msra.mxu0 %v14
  %581 = vmatprep.subr.mxu0 0.0
  %582 = vmatpush1.msra.mxu0 0.0
  %583 = vmatprep.subr.mxu0 0.0
  %584 = vmatpush1.msra.mxu0 0.0
  %585 = vmatprep.subr.mxu0 0.0
  %586 = vmatpush1.msra.mxu0 0.0
  %587 = vmatprep.subr.mxu0 0.0
  %588 = vmatpush1.msra.mxu0 0.0
  %589 = vmatprep.subr.mxu0 0.0
  %590 = vmatpush1.msra.mxu0 0.0
  %591 = vmatprep.subr.mxu0 0.0
  %592 = vmatpush1.msra.mxu0 0.0
  %593 = vmatprep.subr.mxu0 0.0
  %594 = vmatpush1.msra.mxu0 0.0
  %595 = vmatprep.subr.mxu0 0.0
  %596 = vmatpush1.msra.mxu0 0.0
  %597 = vmatprep.subr.mxu0 0.0
  %598 = vmatpush1.msra.mxu0 0.0
  %599 = vmatprep.subr.mxu0 0.0
  %600 = vmatpush1.msra.mxu0 0.0
  %601 = vmatprep.subr.mxu0 0.0
  %602 = vmatpush1.msra.mxu0 0.0
  %603 = vmatprep.subr.mxu0 0.0
  %604 = vmatpush1.msra.mxu0 0.0
  %605 = vmatprep.subr.mxu0 0.0
  %606 = vmatpush1.msra.mxu0 0.0
  %607 = vmatprep.subr.mxu0 0.0
  %608 = vmatpush1.msra.mxu0 0.0
  %609 = vmatprep.subr.mxu0 0.0
  %610 = vmatpush1.msra.mxu0 0.0
  %611 = vmatprep.subr.mxu0 0.0
  %612 = vmatpush1.msra.mxu0 0.0
  %613 = vmatprep.subr.mxu0 0.0
  %614 = vmatpush1.msra.mxu0 0.0
  %615 = vmatprep.subr.mxu0 0.0
  %616 = vmatpush1.msra.mxu0 0.0
  %617 = vmatprep.subr.mxu0 0.0
  %618 = vmatpush1.msra.mxu0 0.0
  %619 = vmatprep.subr.mxu0 0.0
  %620 = vmatpush1.msra.mxu0 0.0
  %621 = vmatprep.subr.mxu0 0.0
  %622 = vmatpush1.msra.mxu0 0.0
  %623 = vmatprep.subr.mxu0 0.0
  %624 = vmatpush1.msra.mxu0 0.0
  %625 = vmatprep.subr.mxu0 0.0
  %626 = vmatpush1.msra.mxu0 0.0
  %627 = vmatprep.subr.mxu0 0.0
  %628 = vmatpush1.msra.mxu0 0.0
  %629 = vmatprep.subr.mxu0 0.0
  %630 = vmatpush1.msra.mxu0 0.0
  %631 = vmatprep.subr.mxu0 0.0
  %632 = vmatpush1.msra.mxu0 0.0
  %633 = vmatprep.subr.mxu0 0.0
  %634 = vmatpush1.msra.mxu0 0.0
  %635 = vmatprep.subr.mxu0 0.0
  %636 = vmatpush1.msra.mxu0 0.0
  %637 = vmatprep.mubr.f32.mxu0 0.0
  %638 = vmatmul.mubr.f32.gmra.mrb[0].mxu0 %v571
  %v639 = vpop.f32.mrb[0].mxu0
  %v640 = vadd.f32 0.0, %v639
  %v641 = vpop.f32.mrb[0].mxu0
  %642 = vdwg.mxu0
  %v643 = vadd.f32 %v569, %v640
  %v644 = vmul.f32 %v20, %v643
  %v645 = vtanh.pop %v644
  %v646 = vmul.f32 %v20, %v645
  %v647 = vadd.f32 %v21, %v646
  %648 = vrot.lane.b32.xlu0 %v647, 96
  %v649 = vpop.permute.xlu0 %648
  %650 = vrot.lane.b32.xlu0 %v647, 64
  %v651 = vpop.permute.xlu0 %650
  %652 = vrot.lane.b32.xlu0 %v647, 32
  %v653 = vpop.permute.xlu0 %652
  %v654 = vmul.f32 %v649, %v565
  %v655 = vmul.f32 %v647, %v651
  %v656 = vadd.f32 %v654, %v655
  %v657 = vtanh.pop %v656
  %v658 = vmul.f32 %v653, %v657
  %s659 = scalar_lea.vmem %s0, 56
  %v660 = vld [vmem:[%s659] sm:$0xff]
  %v662 = vsel %vm23, %v658, 0
  %664 = vmatprep.subr.mxu0 0.0
  %665 = vmatpush1.msra.mxu0 %v11
  %666 = vmatprep.subr.mxu0 0.0
  %667 = vmatpush1.msra.mxu0 %v12
  %668 = vmatprep.subr.mxu0 0.0
  %669 = vmatpush1.msra.mxu0 %v13
  %670 = vmatprep.subr.mxu0 0.0
  %671 = vmatpush1.msra.mxu0 %v14
  %672 = vmatprep.subr.mxu0 0.0
  %673 = vmatpush1.msra.mxu0 0.0
  %674 = vmatprep.subr.mxu0 0.0
  %675 = vmatpush1.msra.mxu0 0.0
  %676 = vmatprep.subr.mxu0 0.0
  %677 = vmatpush1.msra.mxu0 0.0
  %678 = vmatprep.subr.mxu0 0.0
  %679 = vmatpush1.msra.mxu0 0.0
  %680 = vmatprep.subr.mxu0 0.0
  %681 = vmatpush1.msra.mxu0 0.0
  %682 = vmatprep.subr.mxu0 0.0
  %683 = vmatpush1.msra.mxu0 0.0
  %684 = vmatprep.subr.mxu0 0.0
  %685 = vmatpush1.msra.mxu0 0.0
  %686 = vmatprep.subr.mxu0 0.0
  %687 = vmatpush1.msra.mxu0 0.0
  %688 = vmatprep.subr.mxu0 0.0
  %689 = vmatpush1.msra.mxu0 0.0
  %690 = vmatprep.subr.mxu0 0.0
  %691 = vmatpush1.msra.mxu0 0.0
  %692 = vmatprep.subr.mxu0 0.0
  %693 = vmatpush1.msra.mxu0 0.0
  %694 = vmatprep.subr.mxu0 0.0
  %695 = vmatpush1.msra.mxu0 0.0
  %696 = vmatprep.subr.mxu0 0.0
  %697 = vmatpush1.msra.mxu0 0.0
  %698 = vmatprep.subr.mxu0 0.0
  %699 = vmatpush1.msra.mxu0 0.0
  %700 = vmatprep.subr.mxu0 0.0
  %701 = vmatpush1.msra.mxu0 0.0
  %702 = vmatprep.subr.mxu0 0.0
  %703 = vmatpush1.msra.mxu0 0.0
  %704 = vmatprep.subr.mxu0 0.0
  %705 = vmatpush1.msra.mxu0 0.0
  %706 = vmatprep.subr.mxu0 0.0
  %707 = vmatpush1.msra.mxu0 0.0
  %708 = vmatprep.subr.mxu0 0.0
  %709 = vmatpush1.msra.mxu0 0.0
  %710 = vmatprep.subr.mxu0 0.0
  %711 = vmatpush1.msra.mxu0 0.0
  %712 = vmatprep.subr.mxu0 0.0
  %713 = vmatpush1.msra.mxu0 0.0
  %714 = vmatprep.subr.mxu0 0.0
  %715 = vmatpush1.msra.mxu0 0.0
  %716 = vmatprep.subr.mxu0 0.0
  %717 = vmatpush1.msra.mxu0 0.0
  %718 = vmatprep.subr.mxu0 0.0
  %719 = vmatpush1.msra.mxu0 0.0
  %720 = vmatprep.subr.mxu0 0.0
  %721 = vmatpush1.msra.mxu0 0.0
  %722 = vmatprep.subr.mxu0 0.0
  %723 = vmatpush1.msra.mxu0 0.0
  %724 = vmatprep.subr.mxu0 0.0
  %725 = vmatpush1.msra.mxu0 0.0
  %726 = vmatprep.subr.mxu0 0.0
  %727 = vmatpush1.msra.mxu0 0.0
  %728 = vmatprep.mubr.f32.mxu0 0.0
  %729 = vmatmul.mubr.f32.gmra.mrb[0].mxu0 %v662
  %v730 = vpop.f32.mrb[0].mxu0
  %v731 = vadd.f32 0.0, %v730
  %v732 = vpop.f32.mrb[0].mxu0
  %733 = vdwg.mxu0
  %v734 = vadd.f32 %v660, %v731
  %v735 = vmul.f32 %v20, %v734
  %v736 = vtanh.pop %v735
  %v737 = vmul.f32 %v20, %v736
  %v738 = vadd.f32 %v21, %v737
  %739 = vrot.lane.b32.xlu0 %v738, 96
  %v740 = vpop.permute.xlu0 %739
  %741 = vrot.lane.b32.xlu0 %v738, 64
  %v742 = vpop.permute.xlu0 %741
  %743 = vrot.lane.b32.xlu0 %v738, 32
  %v744 = vpop.permute.xlu0 %743
  %v745 = vmul.f32 %v740, %v656
  %v746 = vmul.f32 %v738, %v742
  %v747 = vadd.f32 %v745, %v746
  %v748 = vtanh.pop %v747
  %v749 = vmul.f32 %v744, %v748
  %750 = vst [vmem:[%s2] sm:$0xff] %v749
  // Predicated region
  $region10: #{lstm_classifier_forward.1} parent=0 // pred_check
    _
  $region11: #{lstm_classifier_forward.1} parent=0 // pred_check_branch
    %752 = sbr.rel (0) target = $region13
  $region12: #{lstm_classifier_forward.1} parent=0 // pred_region
    _
  $region13: #{lstm_classifier_forward.1} parent=0 // pred_fallthru
    _
  // Predicated region
  $region14: #{lstm_classifier_forward.1} parent=0 // pred_check
    _
  $region15: #{lstm_classifier_forward.1} parent=0 // pred_check_branch
    %754 = sbr.rel (0) target = $region17
  $region16: #{lstm_classifier_forward.1} parent=0 // pred_region
    _
  $region17: #{lstm_classifier_forward.1} parent=0 // pred_fallthru
    _

</llo_original>
